<compile_context>
chip_gen: v6e
topology: v6e:2x2x1
jax: 0.10.0
libtpu: 0.0.40
codegen_flags: <defaults>
</compile_context>

<pallas_src>
import functools
import math

import jax
import jax.numpy as jnp
from jax.experimental import pallas as pl
from jax.experimental.pallas import tpu as pltpu


# --------------------------------------------------------------------------------------
# Kernel 1: fused folded-BN affine + activation (+ optional second bias), lane-dense.
# --------------------------------------------------------------------------------------
def _fused_affine_act_kernel(x_ref, params_ref, o_ref, *, lane_tile, activation,
                             has_post_shift):
    j = pl.program_id(0)
    if lane_tile % 128 == 0:
        start = pl.multiple_of(j * lane_tile, 128)   # aligned lane-slice hint
    else:
        start = j * lane_tile                        # only hit when grid == (1,)
    lanes = pl.ds(start, lane_tile)

    x = x_ref[...].astype(jnp.float32)               # (rows, lane_tile); f32 compute
    scale = params_ref[0:1, lanes]                   # resident params, sliced in-kernel
    shift = params_ref[1:2, lanes]
    y = x * scale + shift                            # folded BN / LearnableBias

    row = 2
    if activation == "hardtanh":
        y = jnp.clip(y, -1.0, 1.0)                   # nn.Hardtanh
    elif activation == "prelu":
        slope = params_ref[row:row + 1, lanes]       # per-channel PReLU slope
        row += 1
        y = jnp.where(y >= 0, y, y * slope)
    elif activation == "sign":
        y = jnp.where(y >= 0, 1.0, -1.0)             # binarize feeding IRConv2d

    if has_post_shift:
        y = y + params_ref[row:row + 1, lanes]       # RPReLU's second learnable bias

    o_ref[...] = y.astype(o_ref.dtype)


def fused_bn_act(x, scale, shift, *, activation=None, prelu_slope=None, post_shift=None,
                 donate_x=False, target_block_bytes=2 * 1024 * 1024,
                 vmem_limit_bytes=32 * 1024 * 1024):
    """x: (N, C, H, W).  scale/shift (and optional prelu_slope/post_shift): per-channel (C,).

    Computes act(x * scale + shift) [+ post_shift] channel-wise in a single HBM pass.
    """
    N, C, H, W = x.shape
    L = C * H * W
    rows = N

    # Per-channel vectors -> per-lane rows (period H*W per channel), built once.
    def to_row(v):
        v = jnp.asarray(v, jnp.float32).reshape(C)
        return jnp.broadcast_to(v[:, None], (C, H * W)).reshape(1, L)

    prows = [to_row(scale), to_row(shift)]
    if activation == "prelu":
        assert prelu_slope is not None, "prelu activation needs prelu_slope"
        prows.append(to_row(prelu_slope))
    if post_shift is not None:
        prows.append(to_row(post_shift))
    params = jnp.concatenate(prows, axis=0)          # (P<=4, L) f32, one resident block

    # Free collapse of contiguous NCHW to a lane-dense (N, C*H*W) view; lane extent is
    # large (and a multiple of 128 for every ResNet stage) even when H*W < 128.
    x2 = x.reshape(rows, L)

    itemsize = jnp.dtype(x.dtype).itemsize
    if L % 128 == 0:
        units = L // 128                             # 128-lane columns
        max_units = max(1, target_block_bytes // (rows * 128 * itemsize))
        if units >= 2:
            # At least 2 lane blocks so both v7x TensorCores get streaming work.
            max_units = min(max_units, pl.cdiv(units, 2))
        lane_units = 1
        for cand in range(min(units, max_units), 0, -1):
            if units % cand == 0:                    # exact tiling, no ragged last block
                lane_units = cand
                break
        lane_tile = lane_units * 128
    else:
        lane_tile = L                                # full-extent fallback (single block)
    grid = (L // lane_tile,)

    kernel = functools.partial(
        _fused_affine_act_kernel, lane_tile=lane_tile, activation=activation,
        has_post_shift=post_shift is not None)

    # VMEM budget: in+out data blocks double-buffered = 4 * rows * lane_tile * itemsize
    # (~8 MiB at the 2 MiB target) + the resident (8-padded, L) f32 params block.
    # Default buffer depth 2 (no Buffered(3)) and 32 MiB limit fit v7x's 64 MiB VMEM.
    out2 = pl.pallas_call(
        kernel,
        out_shape=jax.ShapeDtypeStruct((rows, L), x.dtype),
        grid=grid,
        in_specs=[
            pl.BlockSpec((rows, lane_tile), lambda j: (0, j)),   # streamed activation tile
            pl.BlockSpec(params.shape, lambda j: (0, 0)),        # resident param rows
        ],
        out_specs=pl.BlockSpec((rows, lane_tile), lambda j: (0, j)),
        input_output_aliases=({0: 0} if donate_x else {}),
        compiler_params=pltpu.CompilerParams(
            dimension_semantics=("parallel",),
            vmem_limit_bytes=vmem_limit_bytes,
        ),
    )(x2, params)

    return out2.reshape(N, C, H, W)


# --------------------------------------------------------------------------------------
# Kernel 2: fused classifier head — global average pool + folded BatchNorm1d + Linear.
# --------------------------------------------------------------------------------------
def _gap_bn_linear_kernel(x_ref, scale_ref, shift_ref, w_ref, b_ref, o_ref):
    x = x_ref[...].astype(jnp.float32)               # (N, C, H*W)
    pooled = jnp.mean(x, axis=-1)                    # (N, C)   AdaptiveAvgPool2d(1)+view
    h = pooled * scale_ref[...] + shift_ref[...]     # folded BatchNorm1d
    out = jnp.dot(h, w_ref[...], preferred_element_type=jnp.float32) + b_ref[...]
    o_ref[...] = out.astype(o_ref.dtype)


def gap_bn_linear(x, bn_scale, bn_shift, weight, bias):
    """x: (N, C, H, W); weight: (num_classes, C); bias: (num_classes,) -> logits (N, K)."""
    N, C, H, W = x.shape
    K = weight.shape[0]
    x3 = x.reshape(N, C, H * W)                      # free collapse of contiguous NCHW
    return pl.pallas_call(
        _gap_bn_linear_kernel,
        out_shape=jax.ShapeDtypeStruct((N, K), jnp.float32),
        compiler_params=pltpu.CompilerParams(vmem_limit_bytes=32 * 1024 * 1024),
    )(x3,
      jnp.asarray(bn_scale, jnp.float32).reshape(1, C),
      jnp.asarray(bn_shift, jnp.float32).reshape(1, C),
      jnp.asarray(weight, jnp.float32).T,            # (C, K)
      jnp.asarray(bias, jnp.float32).reshape(1, K))


def fold_batchnorm(gamma, beta, mean, var, eps=1e-5):
    """Inference-mode BatchNorm folded to y = x * s + t."""
    inv = gamma / jnp.sqrt(var + eps)
    return inv, beta - mean * inv


if __name__ == "__main__":
    keys = iter(jax.random.split(jax.random.PRNGKey(0), 24))

    # ---- stem: conv1 (lax conv, see TODO) -> Pallas fused bn1 + Hardtanh ----
    N, H, W = 2, 16, 16
    Cin, C1 = 3, 16
    x = jax.random.normal(next(keys), (N, Cin, H, W), dtype=jnp.float32)
    w1 = jax.random.normal(next(keys), (C1, Cin, 3, 3), dtype=jnp.float32) * math.sqrt(2.0 / (Cin * 9))
    y = jax.lax.conv_general_dilated(x, w1, (1, 1), "SAME",
                                     dimension_numbers=("NCHW", "OIHW", "NCHW"))

    gamma = 1.0 + 0.1 * jax.random.normal(next(keys), (C1,), jnp.float32)
    beta = 0.1 * jax.random.normal(next(keys), (C1,), jnp.float32)
    mean = 0.1 * jax.random.normal(next(keys), (C1,), jnp.float32)
    var = jnp.abs(1.0 + 0.1 * jax.random.normal(next(keys), (C1,), jnp.float32))
    s1, t1 = fold_batchnorm(gamma, beta, mean, var)

    def bcast(v):
        return v.reshape(1, C1, 1, 1)

    # (1) bn1 + Hardtanh fused (stem epilogue)
    out = jax.block_until_ready(fused_bn_act(y, s1, t1, activation="hardtanh"))
    ref = jnp.clip(y * bcast(s1) + bcast(t1), -1.0, 1.0)
    assert out.shape == y.shape and out.dtype == y.dtype
    assert jnp.allclose(out, ref, atol=1e-5, rtol=1e-5)

    # (2) folded-BN + sign binarize (the prologue feeding IRConv2d) fused in the same pass
    out_sign = jax.block_until_ready(fused_bn_act(y, s1, t1, activation="sign"))
    ref_sign = jnp.where(y * bcast(s1) + bcast(t1) >= 0, 1.0, -1.0)
    assert jnp.allclose(out_sign, ref_sign)

    # (3) ReActNet RPReLU-style fusion: bias -> per-channel PReLU -> second bias, one pass
    b1 = 0.1 * jax.random.normal(next(keys), (C1,), jnp.float32)
    b2 = 0.1 * jax.random.normal(next(keys), (C1,), jnp.float32)
    slope = 0.25 + 0.05 * jax.random.normal(next(keys), (C1,), jnp.float32)
    out_rp = jax.block_until_ready(
        fused_bn_act(y, jnp.ones((C1,), jnp.float32), b1, activation="prelu",
                     prelu_slope=slope, post_shift=b2))
    z = y + bcast(b1)
    ref_rp = jnp.where(z >= 0, z, z * bcast(slope)) + bcast(b2)
    assert jnp.allclose(out_rp, ref_rp, atol=1e-5, rtol=1e-5)

    # (4) bf16 activations (f32 compute inside the kernel, cast on store)
    y_bf = y.astype(jnp.bfloat16)
    out_bf = jax.block_until_ready(fused_bn_act(y_bf, s1, t1, activation="hardtanh"))
    ref_bf = jnp.clip(y_bf.astype(jnp.float32) * bcast(s1) + bcast(t1), -1.0, 1.0)
    assert out_bf.dtype == jnp.bfloat16
    assert jnp.allclose(out_bf.astype(jnp.float32), ref_bf, atol=2e-2, rtol=2e-2)

    # (5) in-place variant: alias the activation buffer (lower peak HBM footprint)
    out_d = jax.block_until_ready(fused_bn_act(y, s1, t1, activation="hardtanh", donate_x=True))
    assert jnp.allclose(out_d, ref, atol=1e-5, rtol=1e-5)

    # ---- head: gap -> view -> bn2 -> linear, fused in one small kernel ----
    C2, K = 64, 10
    h = jax.random.normal(next(keys), (N, C2, 8, 8), dtype=jnp.float32)
    g2 = 1.0 + 0.1 * jax.random.normal(next(keys), (C2,), jnp.float32)
    be2 = 0.1 * jax.random.normal(next(keys), (C2,), jnp.float32)
    m2 = 0.1 * jax.random.normal(next(keys), (C2,), jnp.float32)
    v2 = jnp.abs(1.0 + 0.1 * jax.random.normal(next(keys), (C2,), jnp.float32))
    s2, t2 = fold_batchnorm(g2, be2, m2, v2)
    wl = jax.random.normal(next(keys), (K, C2), jnp.float32) * math.sqrt(2.0 / C2)
    bl = 0.01 * jax.random.normal(next(keys), (K,), jnp.float32)

    logits = jax.block_until_ready(gap_bn_linear(h, s2, t2, wl, bl))
    pooled = h.mean(axis=(2, 3))
    ref_logits = (pooled * s2[None, :] + t2[None, :]) @ wl.T + bl[None, :]
    assert logits.shape == (N, K)
    assert jnp.allclose(logits, ref_logits, atol=2e-2, rtol=2e-2)

    print("KERNEL_OK")
</pallas_src>

<mosaic_0001>
module attributes {stable_mosaic.version = 11 : i64} {
  func.func @_fused_affine_act_kernel(%arg0: i32, %arg1: memref<2x2048xf32, #tpu.memory_space<vmem>>, %arg2: memref<2x4096xf32, #tpu.memory_space<vmem>>, %arg3: memref<2x2048xf32, #tpu.memory_space<vmem>>) attributes {dimension_semantics = [#tpu.dimension_semantics<parallel>], iteration_bounds = array<i64: 2>, scalar_prefetch = 0 : i64, scratch_operands = 0 : i64, tpu.core_type = #tpu.core_type<tc>, window_params = [{transform_indices = @transform_0, window_bounds = array<i64: 2, 2048>}, {pipeline_mode = #tpu.pipeline_mode<synchronous>, transform_indices = @transform_1, window_bounds = array<i64: 2, 4096>}, {transform_indices = @transform_2, window_bounds = array<i64: 2, 2048>}]} {
    %c2048_i32 = arith.constant 2048 : i32
    %0 = arith.muli %arg0, %c2048_i32 : i32
    %1 = tpu.assume_multiple %0, 128 : i32
    %c0 = arith.constant 0 : index
    %c0_0 = arith.constant 0 : index
    %2 = vector.load %arg1[%c0, %c0_0] : memref<2x2048xf32, #tpu.memory_space<vmem>>, vector<2x2048xf32>
    %c0_1 = arith.constant 0 : index
    %3 = arith.index_cast %1 : i32 to index
    %4 = vector.load %arg2[%c0_1, %3] : memref<2x4096xf32, #tpu.memory_space<vmem>>, vector<1x2048xf32>
    %c1 = arith.constant 1 : index
    %5 = arith.index_cast %1 : i32 to index
    %6 = vector.load %arg2[%c1, %5] : memref<2x4096xf32, #tpu.memory_space<vmem>>, vector<1x2048xf32>
    %7 = vector.broadcast %4 : vector<1x2048xf32> to vector<2x2048xf32>
    %8 = arith.mulf %2, %7 : vector<2x2048xf32>
    %9 = vector.broadcast %6 : vector<1x2048xf32> to vector<2x2048xf32>
    %10 = arith.addf %8, %9 : vector<2x2048xf32>
    %cst = arith.constant -1.000000e+00 : f32
    %cst_2 = arith.constant 1.000000e+00 : f32
    %11 = vector.broadcast %cst : f32 to vector<2x2048xf32>
    %12 = arith.maximumf %11, %10 : vector<2x2048xf32>
    %13 = vector.broadcast %cst_2 : f32 to vector<2x2048xf32>
    %14 = arith.minimumf %13, %12 : vector<2x2048xf32>
    %c0_3 = arith.constant 0 : index
    %c0_4 = arith.constant 0 : index
    %15 = vector.load %arg3[%c0_3, %c0_4] : memref<2x2048xf32, #tpu.memory_space<vmem>>, vector<2x2048xf32>
    tpu.vector_store %arg3[%c0_3, %c0_4], %14 {strides = array<i32>} : memref<2x2048xf32, #tpu.memory_space<vmem>>, vector<2x2048xf32>,
    return
  }
  func.func @transform_0(%arg0: i32) -> (i32, i32) {
    %c0_i32 = arith.constant 0 : i32
    %c0_i32_0 = arith.constant 0 : i32
    return %c0_i32, %arg0 : i32, i32
  }
  func.func @transform_1(%arg0: i32) -> (i32, i32) {
    %c0_i32 = arith.constant 0 : i32
    %c0_i32_0 = arith.constant 0 : i32
    %c0_i32_1 = arith.constant 0 : i32
    return %c0_i32, %c0_i32_0 : i32, i32
  }
  func.func @transform_2(%arg0: i32) -> (i32, i32) {
    %c0_i32 = arith.constant 0 : i32
    %c0_i32_0 = arith.constant 0 : i32
    return %c0_i32, %arg0 : i32, i32
  }
}

</mosaic_0001>

<llo_original>
// kernel: tpu_custom_call.1
$region0: #{tpu_custom_call.1}
  #allocation0 [shape = 'u32[]', space=smem, size = 0x4, offset = 0x4, fixed_abs, tag = 'smem constant byte address 0x4 - core index']
  #allocation1 [shape = 'u32[144,128]{1,0:T(1,128)}', space=vmem, size = 0x12000, scoped, tag = 'internal scratch']
  %s0 = inlined_call_operand.hbm [shape: f32[2,4096], index: 0, kind: input, shape index: {}]
  %s1 = inlined_call_operand.hbm [shape: f32[2,4096], index: 1, kind: input, shape index: {}]
  %s2 = inlined_call_operand.hbm [shape: f32[2,4096], index: 2, kind: output, shape index: {}]
  %s3 = sld [smem:[#allocation0]]
  $region49: #{tpu_custom_call.1} parent=0
    _
  %s5 = ssub.s32 1, %s3
  %s6 = scalar_select 0, %s5, %s3
  $region1: #{tpu_custom_call.1} parent=0
    #allocation2 [shape = 'u8[32768]{0}', space=vmem, size = 0x8000, scoped, tag = 'input window, operand 0']
    #allocation3 [shape = 's32[2]{0}', space=sflag, size = 0x8, scoped, tag = 'scoped memory for tpu_custom_call.1']
    #allocation4 [shape = 's32[2]{0}', space=sflag, size = 0x8, scoped, tag = 'scoped memory for tpu_custom_call.1']
    #allocation5 [shape = 'u8[32768]{0}', space=vmem, size = 0x8000, scoped, tag = 'input window, operand 1, single buffered']
    #allocation6 [shape = 's32[1]{0}', space=sflag, size = 0x4, scoped, tag = 'scoped memory for tpu_custom_call.1']
    #allocation7 [shape = 'u8[32768]{0}', space=vmem, size = 0x8000, scoped, tag = 'output window, operand 0']
    %7 = vsyncpa [#allocation3], 0
    %s8 = scalar_lea.sflag [#allocation3], 1
    %9 = vsyncpa %s8, 0
    %10 = vsyncpa [#allocation6], 0
    %11 = vsyncpa [#allocation4], 0
    %s12 = scalar_lea.sflag [#allocation4], 1
    %13 = vsyncpa %s12, 0
    loop: start=0, step=1, limit=4
    $region2: #{tpu_custom_call.1} parent=1 // loop_pre_header
      _
    $region3: #{tpu_custom_call.1} parent=1 // loop_header
      %s15 = sphi 0, %s19
      %p16 = scmp.ge.s32.totalorder %s15, 4
      %s25 = sphi 0, %s27
      %s28 = sphi 0, %s25
      %s29 = sphi 0, %s28
      %s45 = sphi 0, %s29
      %s49 = sphi 0, %s49
      %s51 = sphi 0, %s49
      %s52 = sphi 0, %s51
      %s66 = sphi 0, %s52
      %s72 = sphi 0, %s74
      %s75 = sphi 0, %s72
      %s76 = sphi 0, %s75
      %s92 = sphi 0, %s76
    $region4: #{tpu_custom_call.1} parent=1 // loop_header_branch
      %18 = sbr.rel (%p16) target = $region8
    $region5: #{tpu_custom_call.1} parent=1 // loop_body
      %s20 = ssub.s32 %s15, 1
      %s21 = ssub.s32 %s15, 2
      %s22 = sadd.s32 %s15, 1
      %s23 = ssub.s32 %s15, %s22
      %p24 = scmp.eq.s32.totalorder %s23, 0
      %s26 = sadd.s32 %s25, 1
      %s27 = scalar_select %p24, %s25, %s26
      %p30 = pneg %p24
      %p31 = scmp.eq.s32.totalorder %s15, 1
      %p32 = por %p30, %p31
      %p33 = scmp.ne.s32.totalorder %s25, %s28
      %p34 = scmp.eq.s32.totalorder %s15, 0
      %p35 = por %p33, %p34
      %p36 = scmp.ne.s32.totalorder %s25, %s28
      %p37 = scmp.eq.s32.totalorder %s20, 1
      %p38 = por %p36, %p37
      %p39 = scmp.ne.s32.totalorder %s28, %s29
      %p40 = scmp.eq.s32.totalorder %s20, 0
      %p41 = por %p39, %p40
      %p42 = scmp.ne.s32.totalorder %s28, %s29
      %p43 = scmp.eq.s32.totalorder %s21, 1
      %p44 = por %p42, %p43
      %p46 = scmp.ne.s32.totalorder %s29, %s45
      %p47 = scmp.eq.s32.totalorder %s21, 0
      %p48 = por %p46, %p47
      %s50 = sadd.s32 %s49, 1
      %p53 = scmp.eq.s32.totalorder %s15, 1
      %p54 = scmp.ne.s32.totalorder %s49, %s51
      %p55 = scmp.eq.s32.totalorder %s15, 0
      %p56 = por %p54, %p55
      %p57 = scmp.ne.s32.totalorder %s49, %s51
      %p58 = scmp.eq.s32.totalorder %s20, 1
      %p59 = por %p57, %p58
      %p60 = scmp.ne.s32.totalorder %s51, %s52
      %p61 = scmp.eq.s32.totalorder %s20, 0
      %p62 = por %p60, %p61
      %p63 = scmp.ne.s32.totalorder %s51, %s52
      %p64 = scmp.eq.s32.totalorder %s21, 1
      %p65 = por %p63, %p64
      %p67 = scmp.ne.s32.totalorder %s52, %s66
      %p68 = scmp.eq.s32.totalorder %s21, 0
      %p69 = por %p67, %p68
      %s70 = ssub.s32 %s15, %s22
      %p71 = scmp.eq.s32.totalorder %s70, 0
      %s73 = sadd.s32 %s72, 1
      %s74 = scalar_select %p71, %s72, %s73
      %p77 = pneg %p71
      %p78 = scmp.eq.s32.totalorder %s15, 1
      %p79 = por %p77, %p78
      %p80 = scmp.ne.s32.totalorder %s72, %s75
      %p81 = scmp.eq.s32.totalorder %s15, 0
      %p82 = por %p80, %p81
      %p83 = scmp.ne.s32.totalorder %s72, %s75
      %p84 = scmp.eq.s32.totalorder %s20, 1
      %p85 = por %p83, %p84
      %p86 = scmp.ne.s32.totalorder %s75, %s76
      %p87 = scmp.eq.s32.totalorder %s20, 0
      %p88 = por %p86, %p87
      %p89 = scmp.ne.s32.totalorder %s75, %s76
      %p90 = scmp.eq.s32.totalorder %s21, 1
      %p91 = por %p89, %p90
      %p93 = scmp.ne.s32.totalorder %s76, %s92
      %p94 = scmp.eq.s32.totalorder %s21, 0
      %p95 = por %p93, %p94
      %p96 = scmp.le.s32.totalorder 1, %s15
      %p97 = scmp.lt.s32.totalorder %s15, 3
      %p98 = pnand %p96, %p97
      %p99 = pneg %p98
      // Predicated region
      $region9: #{tpu_custom_call.1} parent=5 // pred_check
        _
      $region10: #{tpu_custom_call.1} parent=5 // pred_check_branch
        %101 = sbr.rel (%p98) target = $region12
      $region11: #{tpu_custom_call.1} parent=5 // pred_region
        %s102 = ssub.s32 %s15, 1
        // Predicated region
        $region13: #{tpu_custom_call.1} parent=11 // pred_check
          %p103 = pneg %p62
        $region14: #{tpu_custom_call.1} parent=11 // pred_check_branch
          %105 = sbr.rel (%p103) target = $region16
        $region15: #{tpu_custom_call.1} parent=11 // pred_region
          %s107 = ssub.s32 1024, 1024
          %108 = vsyncadd [#allocation6], %s107
          %s110 = sshll.u32 [#allocation5], 4
          %s111 = int_to_ptr.vmem [resolvable:$true] %s110
          %113 = dma.hbm_to_vmem [thread:$0]  %s1, 1024, %s111, [#allocation6]
        $region16: #{tpu_custom_call.1} parent=11 // pred_fallthru
          _
      $region12: #{tpu_custom_call.1} parent=5 // pred_fallthru
        _
      %p114 = scmp.lt.s32.totalorder %s15, 2
      // Predicated region
      $region17: #{tpu_custom_call.1} parent=5 // pred_check
        %p115 = pneg %p114
      $region18: #{tpu_custom_call.1} parent=5 // pred_check_branch
        %117 = sbr.rel (%p115) target = $region20
      $region19: #{tpu_custom_call.1} parent=5 // pred_region
        // Predicated region
        $region21: #{tpu_custom_call.1} parent=19 // pred_check
          %p118 = pneg %p35
        $region22: #{tpu_custom_call.1} parent=19 // pred_check_branch
          %120 = sbr.rel (%p118) target = $region24
        $region23: #{tpu_custom_call.1} parent=19 // pred_region
          %s121 = sand.u32 %s25, 1
          %s122 = scalar_lea.sflag [#allocation3], %s121
          %s123 = sand.u32 %s25, 1
          %s124 = smul.addr %s123, 32
          %s125 = scalar_lea.vmem [#allocation2], %s124
          %s126 = smul.u32 16, %s15
          %s128 = ssub.s32 512, 512
          %129 = vsyncadd %s122, %s128
          %s130 = smul.addr %s126, 32
          %s131 = scalar_lea.hbm %s0, %s130
          %s133 = sshll.u32 %s125, 4
          %s134 = int_to_ptr.vmem [resolvable:$true] %s133
          %136 = dma.hbm_to_vmem [thread:$0]  %s131, 512, %s134, %s122
        $region24: #{tpu_custom_call.1} parent=19 // pred_fallthru
          _
      $region20: #{tpu_custom_call.1} parent=5 // pred_fallthru
        _
      %p137 = scmp.le.s32.totalorder 1, %s15
      %p138 = scmp.lt.s32.totalorder %s15, 3
      %p139 = pnand %p137, %p138
      %p140 = pneg %p139
      // Predicated region
      $region25: #{tpu_custom_call.1} parent=5 // pred_check
        _
      $region26: #{tpu_custom_call.1} parent=5 // pred_check_branch
        %142 = sbr.rel (%p139) target = $region28
      $region27: #{tpu_custom_call.1} parent=5 // pred_region
        %s143 = ssub.s32 %s15, 1
        %s144 = sand.u32 %s28, 1
        %s145 = scalar_lea.sflag [#allocation3], %s144
        %s146 = sand.u32 %s28, 1
        %s147 = smul.addr %s146, 32
        %s148 = scalar_lea.vmem [#allocation2], %s147
        // Predicated region
        $region29: #{tpu_custom_call.1} parent=27 // pred_check
          %p149 = pneg %p41
        $region30: #{tpu_custom_call.1} parent=27 // pred_check_branch
          %151 = sbr.rel (%p149) target = $region32
        $region31: #{tpu_custom_call.1} parent=27 // pred_region
          %152 = dma.done %s145, 512
        $region32: #{tpu_custom_call.1} parent=27 // pred_fallthru
          _
        // Predicated region
        $region33: #{tpu_custom_call.1} parent=27 // pred_check
          %p153 = pneg %p62
        $region34: #{tpu_custom_call.1} parent=27 // pred_check_branch
          %155 = sbr.rel (%p153) target = $region36
        $region35: #{tpu_custom_call.1} parent=27 // pred_region
          %156 = dma.done [#allocation6], 1024
        $region36: #{tpu_custom_call.1} parent=27 // pred_fallthru
          _
        %s157 = sand.u32 %s28, 1
        %s158 = scalar_lea.sflag [#allocation3], %s157
        %s159 = sand.u32 %s28, 1
        %s160 = smul.addr %s159, 32
        %s161 = scalar_lea.vmem [#allocation2], %s160
        %p162 = pneg %p41
        %p163 = pneg %p38
        %p164 = pneg %p62
        %p165 = pneg %p59
        %p166 = pneg %p88
        %p167 = pneg %p85
        %s168 = sand.u32 %s75, 1
        %s169 = scalar_lea.sflag [#allocation4], %s168
        %s170 = sand.u32 %s75, 1
        %s171 = smul.addr %s170, 32
        %s172 = scalar_lea.vmem [#allocation7], %s171
        %s173 = smul.u32 16, %s20
        %s174 = smul.u32 16, %s20
        %s175 = smul.u32 %s20, 2048
        %v176 = vld [vmem:[%s148] sm:$0xff]
        %v177 = vld [vmem:[%s148 + $0x8] sm:$0xff]
        %v178 = vld [vmem:[%s148 + $0x10] sm:$0xff]
        %v179 = vld [vmem:[%s148 + $0x18] sm:$0xff]
        %s180 = sshra.s32 %s175, 7
        %s181 = sand.u32 %s175, 127
        %s182 = smul.addr %s180, 2
        %s183 = scalar_lea.vmem [#allocation5], %s182
        %v184 = vld [vmem:[%s183] ss:$2 sm:$0xff]
        %s185 = scalar_lea.vmem %s183, 16 [#allocation5]
        %v186 = vld [vmem:[%s185] ss:$2 sm:$0xff]
        %s187 = scalar_lea.vmem %s183, 1 [#allocation5]
        %v188 = vld [vmem:[%s187] ss:$2 sm:$0xff]
        %s189 = scalar_lea.vmem %s183, 17 [#allocation5]
        %v190 = vld [vmem:[%s189] ss:$2 sm:$0xff]
        %v193 = vlaneseq
        %v194 = vshrl.u32 %v193, 7
        %v195 = vsub.s32 0, %v194
        %v196 = vrot.slane %v184, %v195
        %v197 = vlaneseq
        %v198 = vshrl.u32 %v197, 7
        %v199 = vsub.s32 1, %v198
        %v200 = vrot.slane %v184, %v199
        %v201 = vlaneseq
        %v202 = vshrl.u32 %v201, 7
        %v203 = vsub.s32 2, %v202
        %v204 = vrot.slane %v184, %v203
        %v205 = vlaneseq
        %v206 = vshrl.u32 %v205, 7
        %v207 = vsub.s32 3, %v206
        %v208 = vrot.slane %v184, %v207
        %v209 = vlaneseq
        %v210 = vshrl.u32 %v209, 7
        %v211 = vsub.s32 4, %v210
        %v212 = vrot.slane %v184, %v211
        %v213 = vlaneseq
        %v214 = vshrl.u32 %v213, 7
        %v215 = vsub.s32 5, %v214
        %v216 = vrot.slane %v184, %v215
        %v217 = vlaneseq
        %v218 = vshrl.u32 %v217, 7
        %v219 = vsub.s32 6, %v218
        %v220 = vrot.slane %v184, %v219
        %v221 = vlaneseq
        %v222 = vshrl.u32 %v221, 7
        %v223 = vsub.s32 7, %v222
        %v224 = vrot.slane %v184, %v223
        %v225 = vlaneseq
        %v226 = vshrl.u32 %v225, 7
        %v227 = vsub.s32 0, %v226
        %v228 = vrot.slane %v186, %v227
        %v229 = vlaneseq
        %v230 = vshrl.u32 %v229, 7
        %v231 = vsub.s32 1, %v230
        %v232 = vrot.slane %v186, %v231
        %v233 = vlaneseq
        %v234 = vshrl.u32 %v233, 7
        %v235 = vsub.s32 2, %v234
        %v236 = vrot.slane %v186, %v235
        %v237 = vlaneseq
        %v238 = vshrl.u32 %v237, 7
        %v239 = vsub.s32 3, %v238
        %v240 = vrot.slane %v186, %v239
        %v241 = vlaneseq
        %v242 = vshrl.u32 %v241, 7
        %v243 = vsub.s32 4, %v242
        %v244 = vrot.slane %v186, %v243
        %v245 = vlaneseq
        %v246 = vshrl.u32 %v245, 7
        %v247 = vsub.s32 5, %v246
        %v248 = vrot.slane %v186, %v247
        %v249 = vlaneseq
        %v250 = vshrl.u32 %v249, 7
        %v251 = vsub.s32 6, %v250
        %v252 = vrot.slane %v186, %v251
        %v253 = vlaneseq
        %v254 = vshrl.u32 %v253, 7
        %v255 = vsub.s32 7, %v254
        %v256 = vrot.slane %v186, %v255
        %v257 = vcombine.low %v196, %v200
        %v258 = vcombine.low %v204, %v208
        %v260 = vunpack.c.l.s4 1983009808
        %v261 = vunpack.c.0.s8 %v260
        %v262 = vlaneseq
        %v263 = vshrl.u32 %v262, 7
        %v264 = vsub.s32 %v261, %v263
        %v265 = vrot.slane %v257, %v264
        %v267 = vunpack.c.l.s4 1983009808
        %v268 = vunpack.c.0.s8 %v267
        %v269 = vlaneseq
        %v270 = vshrl.u32 %v269, 7
        %v271 = vsub.s32 %v268, %v270
        %v272 = vrot.slane %v258, %v271
        %v273 = vcombine.low %v265, %v272
        %v274 = vcombine.low %v212, %v216
        %v275 = vcombine.low %v220, %v224
        %v277 = vunpack.c.l.s4 1983009808
        %v278 = vunpack.c.0.s8 %v277
        %v279 = vlaneseq
        %v280 = vshrl.u32 %v279, 7
        %v281 = vsub.s32 %v278, %v280
        %v282 = vrot.slane %v274, %v281
        %v284 = vunpack.c.l.s4 1983009808
        %v285 = vunpack.c.0.s8 %v284
        %v286 = vlaneseq
        %v287 = vshrl.u32 %v286, 7
        %v288 = vsub.s32 %v285, %v287
        %v289 = vrot.slane %v275, %v288
        %v290 = vcombine.low %v282, %v289
        %v291 = vcombine.low %v228, %v232
        %v292 = vcombine.low %v236, %v240
        %v294 = vunpack.c.l.s4 1983009808
        %v295 = vunpack.c.0.s8 %v294
        %v296 = vlaneseq
        %v297 = vshrl.u32 %v296, 7
        %v298 = vsub.s32 %v295, %v297
        %v299 = vrot.slane %v291, %v298
        %v301 = vunpack.c.l.s4 1983009808
        %v302 = vunpack.c.0.s8 %v301
        %v303 = vlaneseq
        %v304 = vshrl.u32 %v303, 7
        %v305 = vsub.s32 %v302, %v304
        %v306 = vrot.slane %v292, %v305
        %v307 = vcombine.low %v299, %v306
        %v308 = vcombine.low %v244, %v248
        %v309 = vcombine.low %v252, %v256
        %v311 = vunpack.c.l.s4 1983009808
        %v312 = vunpack.c.0.s8 %v311
        %v313 = vlaneseq
        %v314 = vshrl.u32 %v313, 7
        %v315 = vsub.s32 %v312, %v314
        %v316 = vrot.slane %v308, %v315
        %v318 = vunpack.c.l.s4 1983009808
        %v319 = vunpack.c.0.s8 %v318
        %v320 = vlaneseq
        %v321 = vshrl.u32 %v320, 7
        %v322 = vsub.s32 %v319, %v321
        %v323 = vrot.slane %v309, %v322
        %v324 = vcombine.low %v316, %v323
        %v329 = vmul.f32 %v176, %v273
        %v330 = vmul.f32 %v177, %v290
        %v331 = vmul.f32 %v178, %v307
        %v332 = vmul.f32 %v179, %v324
        %v335 = vlaneseq
        %v336 = vshrl.u32 %v335, 7
        %v337 = vsub.s32 0, %v336
        %v338 = vrot.slane %v188, %v337
        %v339 = vlaneseq
        %v340 = vshrl.u32 %v339, 7
        %v341 = vsub.s32 1, %v340
        %v342 = vrot.slane %v188, %v341
        %v343 = vlaneseq
        %v344 = vshrl.u32 %v343, 7
        %v345 = vsub.s32 2, %v344
        %v346 = vrot.slane %v188, %v345
        %v347 = vlaneseq
        %v348 = vshrl.u32 %v347, 7
        %v349 = vsub.s32 3, %v348
        %v350 = vrot.slane %v188, %v349
        %v351 = vlaneseq
        %v352 = vshrl.u32 %v351, 7
        %v353 = vsub.s32 4, %v352
        %v354 = vrot.slane %v188, %v353
        %v355 = vlaneseq
        %v356 = vshrl.u32 %v355, 7
        %v357 = vsub.s32 5, %v356
        %v358 = vrot.slane %v188, %v357
        %v359 = vlaneseq
        %v360 = vshrl.u32 %v359, 7
        %v361 = vsub.s32 6, %v360
        %v362 = vrot.slane %v188, %v361
        %v363 = vlaneseq
        %v364 = vshrl.u32 %v363, 7
        %v365 = vsub.s32 7, %v364
        %v366 = vrot.slane %v188, %v365
        %v367 = vlaneseq
        %v368 = vshrl.u32 %v367, 7
        %v369 = vsub.s32 0, %v368
        %v370 = vrot.slane %v190, %v369
        %v371 = vlaneseq
        %v372 = vshrl.u32 %v371, 7
        %v373 = vsub.s32 1, %v372
        %v374 = vrot.slane %v190, %v373
        %v375 = vlaneseq
        %v376 = vshrl.u32 %v375, 7
        %v377 = vsub.s32 2, %v376
        %v378 = vrot.slane %v190, %v377
        %v379 = vlaneseq
        %v380 = vshrl.u32 %v379, 7
        %v381 = vsub.s32 3, %v380
        %v382 = vrot.slane %v190, %v381
        %v383 = vlaneseq
        %v384 = vshrl.u32 %v383, 7
        %v385 = vsub.s32 4, %v384
        %v386 = vrot.slane %v190, %v385
        %v387 = vlaneseq
        %v388 = vshrl.u32 %v387, 7
        %v389 = vsub.s32 5, %v388
        %v390 = vrot.slane %v190, %v389
        %v391 = vlaneseq
        %v392 = vshrl.u32 %v391, 7
        %v393 = vsub.s32 6, %v392
        %v394 = vrot.slane %v190, %v393
        %v395 = vlaneseq
        %v396 = vshrl.u32 %v395, 7
        %v397 = vsub.s32 7, %v396
        %v398 = vrot.slane %v190, %v397
        %v399 = vcombine.low %v338, %v342
        %v400 = vcombine.low %v346, %v350
        %v402 = vunpack.c.l.s4 1983009808
        %v403 = vunpack.c.0.s8 %v402
        %v404 = vlaneseq
        %v405 = vshrl.u32 %v404, 7
        %v406 = vsub.s32 %v403, %v405
        %v407 = vrot.slane %v399, %v406
        %v409 = vunpack.c.l.s4 1983009808
        %v410 = vunpack.c.0.s8 %v409
        %v411 = vlaneseq
        %v412 = vshrl.u32 %v411, 7
        %v413 = vsub.s32 %v410, %v412
        %v414 = vrot.slane %v400, %v413
        %v415 = vcombine.low %v407, %v414
        %v416 = vcombine.low %v354, %v358
        %v417 = vcombine.low %v362, %v366
        %v419 = vunpack.c.l.s4 1983009808
        %v420 = vunpack.c.0.s8 %v419
        %v421 = vlaneseq
        %v422 = vshrl.u32 %v421, 7
        %v423 = vsub.s32 %v420, %v422
        %v424 = vrot.slane %v416, %v423
        %v426 = vunpack.c.l.s4 1983009808
        %v427 = vunpack.c.0.s8 %v426
        %v428 = vlaneseq
        %v429 = vshrl.u32 %v428, 7
        %v430 = vsub.s32 %v427, %v429
        %v431 = vrot.slane %v417, %v430
        %v432 = vcombine.low %v424, %v431
        %v433 = vcombine.low %v370, %v374
        %v434 = vcombine.low %v378, %v382
        %v436 = vunpack.c.l.s4 1983009808
        %v437 = vunpack.c.0.s8 %v436
        %v438 = vlaneseq
        %v439 = vshrl.u32 %v438, 7
        %v440 = vsub.s32 %v437, %v439
        %v441 = vrot.slane %v433, %v440
        %v443 = vunpack.c.l.s4 1983009808
        %v444 = vunpack.c.0.s8 %v443
        %v445 = vlaneseq
        %v446 = vshrl.u32 %v445, 7
        %v447 = vsub.s32 %v444, %v446
        %v448 = vrot.slane %v434, %v447
        %v449 = vcombine.low %v441, %v448
        %v450 = vcombine.low %v386, %v390
        %v451 = vcombine.low %v394, %v398
        %v453 = vunpack.c.l.s4 1983009808
        %v454 = vunpack.c.0.s8 %v453
        %v455 = vlaneseq
        %v456 = vshrl.u32 %v455, 7
        %v457 = vsub.s32 %v454, %v456
        %v458 = vrot.slane %v450, %v457
        %v460 = vunpack.c.l.s4 1983009808
        %v461 = vunpack.c.0.s8 %v460
        %v462 = vlaneseq
        %v463 = vshrl.u32 %v462, 7
        %v464 = vsub.s32 %v461, %v463
        %v465 = vrot.slane %v451, %v464
        %v466 = vcombine.low %v458, %v465
        %v471 = vadd.f32 %v329, %v415
        %v472 = vadd.f32 %v330, %v432
        %v473 = vadd.f32 %v331, %v449
        %v474 = vadd.f32 %v332, %v466
        %v475 = vmax.f32 %v471, -1.0
        %v476 = vmax.f32 %v472, -1.0
        %v477 = vmax.f32 %v473, -1.0
        %v478 = vmax.f32 %v474, -1.0
        %v479 = vmin.f32 %v475, 1.0
        %v480 = vmin.f32 %v476, 1.0
        %v481 = vmin.f32 %v477, 1.0
        %v482 = vmin.f32 %v478, 1.0
        %483 = vst [vmem:[%s172] sm:$0xff] %v479
        %484 = vst [vmem:[%s172 + $0x8] sm:$0xff] %v480
        %485 = vst [vmem:[%s172 + $0x10] sm:$0xff] %v481
        %486 = vst [vmem:[%s172 + $0x18] sm:$0xff] %v482
        %s487 = sand.u32 %s75, 1
        %s488 = scalar_lea.sflag [#allocation4], %s487
        %s489 = sand.u32 %s75, 1
        %s490 = smul.addr %s489, 32
        %s491 = scalar_lea.vmem [#allocation7], %s490
        // Predicated region
        $region37: #{tpu_custom_call.1} parent=27 // pred_check
          %p492 = pneg %p85
        $region38: #{tpu_custom_call.1} parent=27 // pred_check_branch
          %494 = sbr.rel (%p492) target = $region40
        $region39: #{tpu_custom_call.1} parent=27 // pred_region
          %s495 = smul.u32 16, %s20
          %s497 = ssub.s32 512, 512
          %498 = vsyncadd %s488, %s497
          %s499 = smul.addr %s495, 32
          %s500 = scalar_lea.hbm %s2, %s499
          %s502 = sshll.u32 %s491, 4
          %s503 = int_to_ptr.vmem [resolvable:$true] %s502
          %505 = dma.vmem_to_hbm [thread:$0]  %s503, 512, %s500, %s488
        $region40: #{tpu_custom_call.1} parent=27 // pred_fallthru
          _
      $region28: #{tpu_custom_call.1} parent=5 // pred_fallthru
        _
      %p506 = scmp.le.s32.totalorder 2, %s15
      // Predicated region
      $region41: #{tpu_custom_call.1} parent=5 // pred_check
        %p507 = pneg %p506
      $region42: #{tpu_custom_call.1} parent=5 // pred_check_branch
        %509 = sbr.rel (%p507) target = $region44
      $region43: #{tpu_custom_call.1} parent=5 // pred_region
        %s510 = ssub.s32 %s15, 2
        // Predicated region
        $region45: #{tpu_custom_call.1} parent=43 // pred_check
          %p511 = pneg %p91
        $region46: #{tpu_custom_call.1} parent=43 // pred_check_branch
          %513 = sbr.rel (%p511) target = $region48
        $region47: #{tpu_custom_call.1} parent=43 // pred_region
          %s514 = sand.u32 %s76, 1
          %s515 = scalar_lea.sflag [#allocation4], %s514
          %s516 = sand.u32 %s76, 1
          %s517 = smul.addr %s516, 32
          %s518 = scalar_lea.vmem [#allocation7], %s517
          %519 = dma.done %s515, 512
        $region48: #{tpu_custom_call.1} parent=43 // pred_fallthru
          _
      $region44: #{tpu_custom_call.1} parent=5 // pred_fallthru
        _
    $region6: #{tpu_custom_call.1} parent=1 // loop_footer
      %s19 = sadd.s32 1, %s15
    $region7: #{tpu_custom_call.1} parent=1 // loop_footer_branch
      %14 = sbr.rel target = $region3
    $region8: #{tpu_custom_call.1} parent=1 // loop_exit
      _
    %520 = vsyncpa [#allocation3], 1
    %s521 = scalar_lea.sflag [#allocation3], 1
    %522 = vsyncpa %s521, 1
    %523 = vsyncpa [#allocation6], 1
    %524 = vsyncpa [#allocation4], 1
    %s525 = scalar_lea.sflag [#allocation4], 1
    %526 = vsyncpa %s525, 1

</llo_original>
